<compile_context>
chip_gen: v6e
topology: v6e:2x2x1
jax: 0.10.0
libtpu: 0.0.40
codegen_flags: <defaults>
</compile_context>

<pallas_src>
import functools

import numpy as np
import jax
import jax.numpy as jnp
from jax.experimental import pallas as pl
from jax.experimental.pallas import tpu as pltpu


_FUSED_VMEM_BUDGET = 20 * 1024 * 1024  # conservative vs v7x 32 MiB default scoped VMEM


def _round_up(x, m):
    return int((int(x) + int(m) - 1) // int(m)) * int(m)


# ----------------------------------------------------------------------------
# Fused whole-model kernel (small graphs: everything resident in VMEM)
#   x0  = A @ E
#   ego = beta * (A @ ego) + alpha * x0        (layers 1..L-1)
#   out = ego / gamma
# ----------------------------------------------------------------------------
def _mgdcf_fused_kernel(adj_ref, ego_ref, o_ref, *, n_layers, alpha, beta, inv_gamma):
    adj = adj_ref[...]
    x0 = jnp.dot(adj, ego_ref[...], preferred_element_type=jnp.float32)
    ego = x0
    for _ in range(1, n_layers):
        ego = (jnp.dot(adj, ego.astype(adj.dtype),
                       preferred_element_type=jnp.float32) * beta + x0 * alpha)
    o_ref[...] = (ego * inv_gamma).astype(o_ref.dtype)


def _mgdcf_fused(adj, ego, *, n_layers, alpha, beta, gamma):
    N, D = ego.shape
    kernel = functools.partial(_mgdcf_fused_kernel, n_layers=int(n_layers),
                               alpha=float(alpha), beta=float(beta),
                               inv_gamma=float(1.0 / gamma))
    # No grid: whole arrays live in VMEM for the duration of the call.
    return pl.pallas_call(
        kernel,
        out_shape=jax.ShapeDtypeStruct((N, D), jnp.float32),
    )(adj, ego)


# ----------------------------------------------------------------------------
# Tiled per-layer kernels (large graphs)
#   out_block accumulates A_tile @ E_tile over k; epilogue fuses
#   beta * acc + alpha * x0, then * scale  (scale = 1/gamma on the last layer)
# ----------------------------------------------------------------------------
def _prop_dense_kernel(adj_ref, e_ref, *rest, beta, alpha, scale, use_x0):
    if use_x0:
        x0_ref, o_ref = rest
    else:
        (o_ref,) = rest
    k = pl.program_id(1)
    last = pl.num_programs(1) - 1

    @pl.when(k == 0)
    def _():
        o_ref[...] = jnp.zeros_like(o_ref)

    # Accumulate straight into the (f32) output block — no scratch, no copy.
    o_ref[...] += jnp.dot(adj_ref[...], e_ref[...],
                          preferred_element_type=jnp.float32)

    if use_x0:
        @pl.when(k == last)
        def _():
            o_ref[...] = (o_ref[...] * beta
                          + x0_ref[...].astype(jnp.float32) * alpha) * scale
    elif float(beta) * float(scale) != 1.0:
        c = float(beta) * float(scale)

        @pl.when(k == last)
        def _():
            o_ref[...] = o_ref[...] * c


def _prop_sparse_kernel(ids_ref, cnt_ref, adj_ref, e_ref, *rest,
                        beta, alpha, scale, use_x0):
    """Same as dense, but the k axis walks a per-row-block list of non-zero
    adjacency tiles (scalar prefetch); padded slots are gated by cnt."""
    if use_x0:
        x0_ref, o_ref = rest
    else:
        (o_ref,) = rest
    i = pl.program_id(0)
    k = pl.program_id(1)
    last = pl.num_programs(1) - 1

    @pl.when(k == 0)
    def _():
        o_ref[...] = jnp.zeros_like(o_ref)

    @pl.when(k < cnt_ref[i])
    def _():
        o_ref[...] += jnp.dot(adj_ref[...], e_ref[...],
                              preferred_element_type=jnp.float32)

    if use_x0:
        @pl.when(k == last)
        def _():
            o_ref[...] = (o_ref[...] * beta
                          + x0_ref[...].astype(jnp.float32) * alpha) * scale
    elif float(beta) * float(scale) != 1.0:
        c = float(beta) * float(scale)

        @pl.when(k == last)
        def _():
            o_ref[...] = o_ref[...] * c


def _propagate(adj, e, x0, *, beta, alpha, scale, tm, tk,
               block_ids=None, block_cnt=None):
    """One propagation layer: (beta * (A @ E) + alpha * X0) * scale, tiled."""
    Np = adj.shape[0]
    Dp = e.shape[1]
    n_i = Np // tm
    use_x0 = x0 is not None

    out_shape = jax.ShapeDtypeStruct((Np, Dp), jnp.float32)

    # Double-buffered VMEM estimate; only raise the limit if we would exceed
    # the smallest default scoped budget (v5e 16 MiB).
    need = 2 * (tm * tk * adj.dtype.itemsize + tk * Dp * e.dtype.itemsize
                + tm * Dp * 4 + (tm * Dp * 4 if use_x0 else 0))
    cp = dict(dimension_semantics=("parallel", "arbitrary"))
    if need > 12 * 1024 * 1024:
        cp["vmem_limit_bytes"] = int(need + (8 << 20))
    compiler_params = pltpu.CompilerParams(**cp)

    if block_ids is not None:
        n_k = block_ids.shape[1]
        kernel = functools.partial(_prop_sparse_kernel, beta=float(beta),
                                   alpha=float(alpha), scale=float(scale),
                                   use_x0=use_x0)
        in_specs = [
            pl.BlockSpec((tm, tk), lambda i, k, ids, cnt: (i, ids[i, k])),
            pl.BlockSpec((tk, Dp), lambda i, k, ids, cnt: (ids[i, k], 0)),
        ]
        if use_x0:
            in_specs.append(pl.BlockSpec((tm, Dp), lambda i, k, ids, cnt: (i, 0)))
        grid_spec = pltpu.PrefetchScalarGridSpec(
            num_scalar_prefetch=2,
            grid=(n_i, n_k),
            in_specs=in_specs,
            out_specs=pl.BlockSpec((tm, Dp), lambda i, k, ids, cnt: (i, 0)),
        )
        args = (block_ids, block_cnt, adj, e) + ((x0,) if use_x0 else ())
    else:
        n_k = Np // tk
        kernel = functools.partial(_prop_dense_kernel, beta=float(beta),
                                   alpha=float(alpha), scale=float(scale),
                                   use_x0=use_x0)
        in_specs = [
            pl.BlockSpec((tm, tk), lambda i, k: (i, k)),
            pl.BlockSpec((tk, Dp), lambda i, k: (k, 0)),
        ]
        if use_x0:
            in_specs.append(pl.BlockSpec((tm, Dp), lambda i, k: (i, 0)))
        grid_spec = pltpu.PrefetchScalarGridSpec(
            num_scalar_prefetch=0,
            grid=(n_i, n_k),
            in_specs=in_specs,
            out_specs=pl.BlockSpec((tm, Dp), lambda i, k: (i, 0)),
        )
        args = (adj, e) + ((x0,) if use_x0 else ())

    return pl.pallas_call(kernel, out_shape=out_shape, grid_spec=grid_spec,
                          compiler_params=compiler_params)(*args)


def _choose_tiles(N, D, tm, tk):
    Dp = _round_up(max(D, 128), 128)
    if tk is None:
        tk = min(512, _round_up(N, 128))          # big K tile: fills the 256-wide MXU
    if tm is None:
        tm = tk
        np0 = _round_up(N, tk)
        if np0 // tm < 2 and np0 >= 256:          # >= 2 i-blocks: both v7x TCs get work
            tm = np0 // 2
    Np = _round_up(N, int(np.lcm(int(tm), int(tk))))
    return Np, Dp, int(tm), int(tk)


def _block_structure(adj_np, Np, tm, tk):
    """Per-row-block list of non-zero adjacency column blocks (host-side)."""
    n_i, n_k = Np // tm, Np // tk
    N = adj_np.shape[0]
    mask = np.zeros((n_i, n_k), dtype=bool)
    for i in range(n_i):
        r0, r1 = i * tm, min((i + 1) * tm, N)
        if r0 >= N:
            continue
        row = adj_np[r0:r1]
        for k in range(n_k):
            c0, c1 = k * tk, min((k + 1) * tk, N)
            if c0 >= N:
                continue
            mask[i, k] = bool(np.any(row[:, c0:c1]))
    cnt = mask.sum(axis=1).astype(np.int32)
    max_nnz = int(max(int(cnt.max()), 1))
    if max_nnz >= n_k:
        return None, None                          # no savings: use dense schedule
    ids = np.zeros((n_i, max_nnz), dtype=np.int32)
    for i in range(n_i):
        nz = np.nonzero(mask[i])[0]
        if nz.size == 0:
            continue                               # cnt == 0 -> accumulate never fires
        ids[i, :nz.size] = nz
        ids[i, nz.size:] = nz[-1]                  # pad (DMA only; compute gated by cnt)
    return jnp.asarray(ids), jnp.asarray(cnt)


def _mgdcf_tiled(norm_adj, ego, *, n_layers, alpha, beta, gamma,
                 compute_dtype, tm, tk, block_skip):
    N, D = ego.shape
    Np, Dp, tm, tk = _choose_tiles(N, D, tm, tk)

    adj = norm_adj
    if Np != N:                                    # pad to tile multiples (zero blocks
        adj = jnp.pad(adj, ((0, Np - N), (0, Np - N)))   # are later skipped anyway)
        ego = jnp.pad(ego, ((0, Np - N), (0, 0)))
    if Dp != D:
        ego = jnp.pad(ego, ((0, 0), (0, Dp - D)))
    adj = adj.astype(compute_dtype)

    block_ids = block_cnt = None
    if block_skip:
        try:
            adj_np = np.asarray(jax.device_get(norm_adj))
        except Exception:
            adj_np = None                          # traced adjacency: dense schedule
        if adj_np is not None:
            block_ids, block_cnt = _block_structure(adj_np, Np, tm, tk)

    # layer 0: x0 = A @ E   (no x0 operand, no epilogue)
    x0 = _propagate(adj, ego.astype(compute_dtype), None,
                    beta=1.0, alpha=0.0, scale=1.0, tm=tm, tk=tk,
                    block_ids=block_ids, block_cnt=block_cnt)
    out = x0
    # layers 1..L-1: ego = beta * (A @ ego) + alpha * x0 ; last layer also /gamma
    for k in range(1, n_layers):
        scale = 1.0 / gamma if k == n_layers - 1 else 1.0
        out = _propagate(adj, out.astype(compute_dtype), x0,
                         beta=beta, alpha=alpha, scale=scale, tm=tm, tk=tk,
                         block_ids=block_ids, block_cnt=block_cnt)
    if n_layers == 1:
        out = out / gamma
    return out[:N, :D]


# ----------------------------------------------------------------------------
# MGDCFEncoder.forward
# ----------------------------------------------------------------------------
def mgdcf_forward(norm_adj, user_emb, item_emb, users, items, *,
                  n_layers=3, alpha=0.1, beta=0.9,
                  compute_dtype=jnp.float32,
                  force_tiled=False, tm=None, tk=None, block_skip=True):
    U, D = user_emb.shape
    N = U + item_emb.shape[0]
    gamma = float(beta ** n_layers + alpha * sum(beta ** i for i in range(n_layers)))

    ego = jnp.concatenate([user_emb, item_emb], axis=0)

    cd = jnp.dtype(compute_dtype)
    fused_bytes = N * N * cd.itemsize + N * D * cd.itemsize + 4 * N * D * 4
    if (not force_tiled) and fused_bytes <= _FUSED_VMEM_BUDGET:
        out = _mgdcf_fused(norm_adj.astype(compute_dtype), ego.astype(compute_dtype),
                           n_layers=n_layers, alpha=alpha, beta=beta, gamma=gamma)
    else:
        out = _mgdcf_tiled(norm_adj, ego, n_layers=n_layers, alpha=alpha, beta=beta,
                           gamma=gamma, compute_dtype=compute_dtype,
                           tm=tm, tk=tk, block_skip=block_skip)

    # Final row gather by user/item ids stays in plain JAX (glue).
    user_out = jnp.take(out[:U], users, axis=0)
    item_out = jnp.take(out[U:], items, axis=0)
    return user_out, item_out


# ----------------------------------------------------------------------------
# Pure-JAX reference (mirrors the PyTorch forward exactly)
# ----------------------------------------------------------------------------
def mgdcf_reference(norm_adj, user_emb, item_emb, users, items,
                    n_layers=3, alpha=0.1, beta=0.9):
    gamma = beta ** n_layers + alpha * sum(beta ** i for i in range(n_layers))
    ego = jnp.concatenate([user_emb, item_emb], axis=0)
    x0 = jnp.zeros_like(ego)
    for k in range(n_layers):
        ego = norm_adj @ ego
        if k == 0:
            x0 = ego
        else:
            ego = ego * beta + x0 * alpha
    ego = ego / gamma
    U = user_emb.shape[0]
    return ego[:U][users], ego[U:][items]


# ----------------------------------------------------------------------------
# Deterministic parameter / input construction
# ----------------------------------------------------------------------------
def xavier_uniform(key, shape):
    fan_in, fan_out = shape
    bound = float(np.sqrt(6.0 / (fan_in + fan_out)))
    return jax.random.uniform(key, shape, jnp.float32, -bound, bound)


def build_norm_adj(key, user_count, item_count):
    """Symmetrically normalized bipartite adjacency (dense realization)."""
    R = (jax.random.uniform(key, (user_count, item_count)) < 0.05).astype(jnp.float32)
    N = user_count + item_count
    A = jnp.zeros((N, N), jnp.float32)
    A = A.at[:user_count, user_count:].set(R)
    A = A.at[user_count:, :user_count].set(R.T)
    deg = A.sum(axis=1)
    d_inv_sqrt = jnp.where(deg > 0, 1.0 / jnp.sqrt(jnp.maximum(deg, 1e-12)), 0.0)
    return A * d_inv_sqrt[:, None] * d_inv_sqrt[None, :]


if __name__ == "__main__":
    user_count, item_count, emb_size = 96, 160, 128   # N = 256
    n_layers, alpha, beta = 3, 0.1, 0.9
    batch = 8

    key = jax.random.PRNGKey(0)
    (k_adj, k_u, k_i, k_users, k_items,
     k_adj2, k_u2, k_i2) = jax.random.split(key, 8)

    norm_adj = build_norm_adj(k_adj, user_count, item_count)
    user_emb = xavier_uniform(k_u, (user_count, emb_size))
    item_emb = xavier_uniform(k_i, (item_count, emb_size))
    users = jax.random.randint(k_users, (batch,), 0, user_count, dtype=jnp.int32)
    items = jax.random.randint(k_items, (batch,), 0, item_count, dtype=jnp.int32)

    u_ref, i_ref = mgdcf_reference(norm_adj, user_emb, item_emb, users, items,
                                   n_layers=n_layers, alpha=alpha, beta=beta)

    # 1) default path at this size: fused single pallas_call, f32
    u_out, i_out = mgdcf_forward(norm_adj, user_emb, item_emb, users, items,
                                 n_layers=n_layers, alpha=alpha, beta=beta)
    jax.block_until_ready((u_out, i_out))
    np.testing.assert_allclose(np.asarray(u_out), np.asarray(u_ref), rtol=1e-5, atol=1e-5)
    np.testing.assert_allclose(np.asarray(i_out), np.asarray(i_ref), rtol=1e-5, atol=1e-5)
    assert u_out.shape == (batch, emb_size) and u_out.dtype == jnp.float32
    assert i_out.shape == (batch, emb_size) and i_out.dtype == jnp.float32

    # 2) tiled per-layer path (large-N configuration), f32, dense schedule
    u_t, i_t = mgdcf_forward(norm_adj, user_emb, item_emb, users, items,
                             n_layers=n_layers, alpha=alpha, beta=beta,
                             force_tiled=True)
    jax.block_until_ready((u_t, i_t))
    np.testing.assert_allclose(np.asarray(u_t), np.asarray(u_ref), rtol=1e-5, atol=1e-5)
    np.testing.assert_allclose(np.asarray(i_t), np.asarray(i_ref), rtol=1e-5, atol=1e-5)

    # 3) bf16 operands + f32 accumulation (bandwidth-bound production config)
    u_b, i_b = mgdcf_forward(norm_adj, user_emb, item_emb, users, items,
                             n_layers=n_layers, alpha=alpha, beta=beta,
                             compute_dtype=jnp.bfloat16)
    jax.block_until_ready((u_b, i_b))
    np.testing.assert_allclose(np.asarray(u_b), np.asarray(u_ref), rtol=5e-2, atol=1e-2)
    np.testing.assert_allclose(np.asarray(i_b), np.asarray(i_ref), rtol=5e-2, atol=1e-2)

    # 4) block-sparse (scalar-prefetch) schedule on a tile-aligned bipartite
    #    graph: the user-user / item-item zero blocks are skipped entirely.
    uc2 = ic2 = 128
    adj2 = build_norm_adj(k_adj2, uc2, ic2)
    ue2 = xavier_uniform(k_u2, (uc2, emb_size))
    ie2 = xavier_uniform(k_i2, (ic2, emb_size))
    users2 = users % uc2
    items2 = items % ic2
    ur2, ir2 = mgdcf_reference(adj2, ue2, ie2, users2, items2,
                               n_layers=n_layers, alpha=alpha, beta=beta)
    us2, is2 = mgdcf_forward(adj2, ue2, ie2, users2, items2,
                             n_layers=n_layers, alpha=alpha, beta=beta,
                             force_tiled=True, tm=128, tk=128, block_skip=True)
    jax.block_until_ready((us2, is2))
    np.testing.assert_allclose(np.asarray(us2), np.asarray(ur2), rtol=1e-5, atol=1e-5)
    np.testing.assert_allclose(np.asarray(is2), np.asarray(ir2), rtol=1e-5, atol=1e-5)

    print("KERNEL_OK")
</pallas_src>

<mosaic_0001>
module attributes {stable_mosaic.version = 11 : i64} {
  func.func @_mgdcf_fused_kernel(%arg0: memref<256x256xf32, #tpu.memory_space<vmem>>, %arg1: memref<256x128xf32, #tpu.memory_space<vmem>>, %arg2: memref<256x128xf32, #tpu.memory_space<vmem>>) attributes {dimension_semantics = [], scalar_prefetch = 0 : i64, scratch_operands = 0 : i64, tpu.core_type = #tpu.core_type<tc>} {
    %c0 = arith.constant 0 : index
    %c0_0 = arith.constant 0 : index
    %0 = vector.load %arg0[%c0, %c0_0] : memref<256x256xf32, #tpu.memory_space<vmem>>, vector<256x256xf32>
    %c0_1 = arith.constant 0 : index
    %c0_2 = arith.constant 0 : index
    %1 = vector.load %arg1[%c0_1, %c0_2] : memref<256x128xf32, #tpu.memory_space<vmem>>, vector<256x128xf32>
    %cst = arith.constant dense<0.000000e+00> : vector<256x128xf32>
    %2 = tpu.matmul %0, %1, %cst {dimension_numbers = #tpu.dot_dimension_numbers<[1], [0], [0], [1], [0, 0, 1, 1], [], []>} : vector<256x256xf32>, vector<256x128xf32>, vector<256x128xf32> -> vector<256x128xf32>
    %cst_3 = arith.constant dense<0.000000e+00> : vector<256x128xf32>
    %3 = tpu.matmul %0, %2, %cst_3 {dimension_numbers = #tpu.dot_dimension_numbers<[1], [0], [0], [1], [0, 0, 1, 1], [], []>} : vector<256x256xf32>, vector<256x128xf32>, vector<256x128xf32> -> vector<256x128xf32>
    %cst_4 = arith.constant 0.899999976 : f32
    %4 = vector.broadcast %cst_4 : f32 to vector<256x128xf32>
    %5 = arith.mulf %3, %4 : vector<256x128xf32>
    %cst_5 = arith.constant 1.000000e-01 : f32
    %6 = vector.broadcast %cst_5 : f32 to vector<256x128xf32>
    %7 = arith.mulf %2, %6 : vector<256x128xf32>
    %8 = arith.addf %5, %7 : vector<256x128xf32>
    %cst_6 = arith.constant dense<0.000000e+00> : vector<256x128xf32>
    %9 = tpu.matmul %0, %8, %cst_6 {dimension_numbers = #tpu.dot_dimension_numbers<[1], [0], [0], [1], [0, 0, 1, 1], [], []>} : vector<256x256xf32>, vector<256x128xf32>, vector<256x128xf32> -> vector<256x128xf32>
    %cst_7 = arith.constant 0.899999976 : f32
    %10 = vector.broadcast %cst_7 : f32 to vector<256x128xf32>
    %11 = arith.mulf %9, %10 : vector<256x128xf32>
    %cst_8 = arith.constant 1.000000e-01 : f32
    %12 = vector.broadcast %cst_8 : f32 to vector<256x128xf32>
    %13 = arith.mulf %2, %12 : vector<256x128xf32>
    %14 = arith.addf %11, %13 : vector<256x128xf32>
    %cst_9 = arith.constant 1.000000e+00 : f32
    %15 = vector.broadcast %cst_9 : f32 to vector<256x128xf32>
    %16 = arith.mulf %14, %15 : vector<256x128xf32>
    %c0_10 = arith.constant 0 : index
    %c0_11 = arith.constant 0 : index
    %17 = vector.load %arg2[%c0_10, %c0_11] : memref<256x128xf32, #tpu.memory_space<vmem>>, vector<256x128xf32>
    tpu.vector_store %arg2[%c0_10, %c0_11], %16 {strides = array<i32>} : memref<256x128xf32, #tpu.memory_space<vmem>>, vector<256x128xf32>,
    return
  }
}

</mosaic_0001>

<llo_original>
// kernel: tpu_custom_call.1
$region0: #{tpu_custom_call.1}
  #allocation0 [shape = 'u32[]', space=smem, size = 0x4, offset = 0x4, fixed_abs, tag = 'smem constant byte address 0x4 - core index']
  #allocation1 [shape = 'u32[144,128]{1,0:T(1,128)}', space=vmem, size = 0x12000, scoped, tag = 'internal scratch']
  %s0 = inlined_call_operand.hbm [shape: f32[256,256], index: 0, kind: input, shape index: {}]
  %s1 = inlined_call_operand.hbm [shape: f32[256,128], index: 1, kind: input, shape index: {}]
  %s2 = inlined_call_operand.hbm [shape: f32[256,128], index: 2, kind: output, shape index: {}]
  %s3 = sld [smem:[#allocation0]]
  $region26: #{tpu_custom_call.1} parent=0
    _
  %s5 = ssub.s32 1, %s3
  %s6 = scalar_select 0, %s5, %s3
  $region1: #{tpu_custom_call.1} parent=0
    #allocation2 [shape = 'u8[262144]{0}', space=vmem, size = 0x40000, scoped, tag = 'input window, operand 0, single buffered']
    #allocation3 [shape = 's32[1]{0}', space=sflag, size = 0x4, scoped, tag = 'scoped memory for tpu_custom_call.1']
    #allocation4 [shape = 's32[1]{0}', space=sflag, size = 0x4, scoped, tag = 'scoped memory for tpu_custom_call.1']
    #allocation5 [shape = 'u8[131072]{0}', space=vmem, size = 0x20000, scoped, tag = 'input window, operand 1, single buffered']
    #allocation6 [shape = 's32[1]{0}', space=sflag, size = 0x4, scoped, tag = 'scoped memory for tpu_custom_call.1']
    #allocation7 [shape = 'u8[131072]{0}', space=vmem, size = 0x20000, scoped, tag = 'output window, operand 0, single buffered']
    %7 = vsyncpa [#allocation3], 0
    %8 = vsyncpa [#allocation6], 0
    %9 = vsyncpa [#allocation4], 0
    // Predicated region
    $region2: #{tpu_custom_call.1} parent=1 // pred_check
      _
    $region3: #{tpu_custom_call.1} parent=1 // pred_check_branch
      %11 = sbr.rel (0) target = $region5
    $region4: #{tpu_custom_call.1} parent=1 // pred_region
      %s13 = ssub.s32 8192, 8192
      %14 = vsyncadd [#allocation3], %s13
      %s15 = sshll.u32 [#allocation2], 4
      %s16 = int_to_ptr.vmem [resolvable:$true] %s15
      %21 = dma.hbm_to_vmem [thread:$0]  %s0, 8192, %s16, [#allocation3], 256, 256, 16
    $region5: #{tpu_custom_call.1} parent=1 // pred_fallthru
      _
    // Predicated region
    $region6: #{tpu_custom_call.1} parent=1 // pred_check
      _
    $region7: #{tpu_custom_call.1} parent=1 // pred_check_branch
      %23 = sbr.rel (0) target = $region9
    $region8: #{tpu_custom_call.1} parent=1 // pred_region
      %s25 = ssub.s32 4096, 4096
      %26 = vsyncadd [#allocation6], %s25
      %s27 = sshll.u32 [#allocation5], 4
      %s28 = int_to_ptr.vmem [resolvable:$true] %s27
      %33 = dma.hbm_to_vmem [thread:$0]  %s1, 4096, %s28, [#allocation6], 128, 128, 8
    $region9: #{tpu_custom_call.1} parent=1 // pred_fallthru
      _
    // Predicated region
    $region10: #{tpu_custom_call.1} parent=1 // pred_check
      _
    $region11: #{tpu_custom_call.1} parent=1 // pred_check_branch
      %35 = sbr.rel (0) target = $region13
    $region12: #{tpu_custom_call.1} parent=1 // pred_region
      %36 = dma.done [#allocation3], 8192
    $region13: #{tpu_custom_call.1} parent=1 // pred_fallthru
      _
    // Predicated region
    $region14: #{tpu_custom_call.1} parent=1 // pred_check
      _
    $region15: #{tpu_custom_call.1} parent=1 // pred_check_branch
      %38 = sbr.rel (0) target = $region17
    $region16: #{tpu_custom_call.1} parent=1 // pred_region
      %39 = dma.done [#allocation6], 4096
    $region17: #{tpu_custom_call.1} parent=1 // pred_fallthru
      _
    %v40 = vld [vmem:[#allocation2] sm:$0xff]
    %v41 = vld [vmem:[#allocation2 + $0x8] sm:$0xff]
    %v42 = vld [vmem:[#allocation2 + $0x10] sm:$0xff]
    %v43 = vld [vmem:[#allocation2 + $0x18] sm:$0xff]
    %v44 = vld [vmem:[#allocation2 + $0x20] sm:$0xff]
    %v45 = vld [vmem:[#allocation2 + $0x28] sm:$0xff]
    %v46 = vld [vmem:[#allocation2 + $0x30] sm:$0xff]
    %v47 = vld [vmem:[#allocation2 + $0x38] sm:$0xff]
    %v48 = vld [vmem:[#allocation2 + $0x40] sm:$0xff]
    %v49 = vld [vmem:[#allocation2 + $0x48] sm:$0xff]
    %v50 = vld [vmem:[#allocation2 + $0x50] sm:$0xff]
    %v51 = vld [vmem:[#allocation2 + $0x58] sm:$0xff]
    %v52 = vld [vmem:[#allocation2 + $0x60] sm:$0xff]
    %v53 = vld [vmem:[#allocation2 + $0x68] sm:$0xff]
    %v54 = vld [vmem:[#allocation2 + $0x70] sm:$0xff]
    %v55 = vld [vmem:[#allocation2 + $0x78] sm:$0xff]
    %v56 = vld [vmem:[#allocation2 + $0x80] sm:$0xff]
    %v57 = vld [vmem:[#allocation2 + $0x88] sm:$0xff]
    %v58 = vld [vmem:[#allocation2 + $0x90] sm:$0xff]
    %v59 = vld [vmem:[#allocation2 + $0x98] sm:$0xff]
    %v60 = vld [vmem:[#allocation2 + $0xa0] sm:$0xff]
    %v61 = vld [vmem:[#allocation2 + $0xa8] sm:$0xff]
    %v62 = vld [vmem:[#allocation2 + $0xb0] sm:$0xff]
    %v63 = vld [vmem:[#allocation2 + $0xb8] sm:$0xff]
    %v64 = vld [vmem:[#allocation2 + $0xc0] sm:$0xff]
    %v65 = vld [vmem:[#allocation2 + $0xc8] sm:$0xff]
    %v66 = vld [vmem:[#allocation2 + $0xd0] sm:$0xff]
    %v67 = vld [vmem:[#allocation2 + $0xd8] sm:$0xff]
    %v68 = vld [vmem:[#allocation2 + $0xe0] sm:$0xff]
    %v69 = vld [vmem:[#allocation2 + $0xe8] sm:$0xff]
    %v70 = vld [vmem:[#allocation2 + $0xf0] sm:$0xff]
    %v71 = vld [vmem:[#allocation2 + $0xf8] sm:$0xff]
    %v72 = vld [vmem:[#allocation2 + $0x100] sm:$0xff]
    %v73 = vld [vmem:[#allocation2 + $0x108] sm:$0xff]
    %v74 = vld [vmem:[#allocation2 + $0x110] sm:$0xff]
    %v75 = vld [vmem:[#allocation2 + $0x118] sm:$0xff]
    %v76 = vld [vmem:[#allocation2 + $0x120] sm:$0xff]
    %v77 = vld [vmem:[#allocation2 + $0x128] sm:$0xff]
    %v78 = vld [vmem:[#allocation2 + $0x130] sm:$0xff]
    %v79 = vld [vmem:[#allocation2 + $0x138] sm:$0xff]
    %v80 = vld [vmem:[#allocation2 + $0x140] sm:$0xff]
    %v81 = vld [vmem:[#allocation2 + $0x148] sm:$0xff]
    %v82 = vld [vmem:[#allocation2 + $0x150] sm:$0xff]
    %v83 = vld [vmem:[#allocation2 + $0x158] sm:$0xff]
    %v84 = vld [vmem:[#allocation2 + $0x160] sm:$0xff]
    %v85 = vld [vmem:[#allocation2 + $0x168] sm:$0xff]
    %v86 = vld [vmem:[#allocation2 + $0x170] sm:$0xff]
    %v87 = vld [vmem:[#allocation2 + $0x178] sm:$0xff]
    %v88 = vld [vmem:[#allocation2 + $0x180] sm:$0xff]
    %v89 = vld [vmem:[#allocation2 + $0x188] sm:$0xff]
    %v90 = vld [vmem:[#allocation2 + $0x190] sm:$0xff]
    %v91 = vld [vmem:[#allocation2 + $0x198] sm:$0xff]
    %v92 = vld [vmem:[#allocation2 + $0x1a0] sm:$0xff]
    %v93 = vld [vmem:[#allocation2 + $0x1a8] sm:$0xff]
    %v94 = vld [vmem:[#allocation2 + $0x1b0] sm:$0xff]
    %v95 = vld [vmem:[#allocation2 + $0x1b8] sm:$0xff]
    %v96 = vld [vmem:[#allocation2 + $0x1c0] sm:$0xff]
    %v97 = vld [vmem:[#allocation2 + $0x1c8] sm:$0xff]
    %v98 = vld [vmem:[#allocation2 + $0x1d0] sm:$0xff]
    %v99 = vld [vmem:[#allocation2 + $0x1d8] sm:$0xff]
    %v100 = vld [vmem:[#allocation2 + $0x1e0] sm:$0xff]
    %v101 = vld [vmem:[#allocation2 + $0x1e8] sm:$0xff]
    %v102 = vld [vmem:[#allocation2 + $0x1f0] sm:$0xff]
    %v103 = vld [vmem:[#allocation2 + $0x1f8] sm:$0xff]
    %v104 = vld [vmem:[#allocation5] sm:$0xff]
    %v105 = vld [vmem:[#allocation5 + $0x8] sm:$0xff]
    %v106 = vld [vmem:[#allocation5 + $0x10] sm:$0xff]
    %v107 = vld [vmem:[#allocation5 + $0x18] sm:$0xff]
    %v108 = vld [vmem:[#allocation5 + $0x20] sm:$0xff]
    %v109 = vld [vmem:[#allocation5 + $0x28] sm:$0xff]
    %v110 = vld [vmem:[#allocation5 + $0x30] sm:$0xff]
    %v111 = vld [vmem:[#allocation5 + $0x38] sm:$0xff]
    %v112 = vld [vmem:[#allocation5 + $0x40] sm:$0xff]
    %v113 = vld [vmem:[#allocation5 + $0x48] sm:$0xff]
    %v114 = vld [vmem:[#allocation5 + $0x50] sm:$0xff]
    %v115 = vld [vmem:[#allocation5 + $0x58] sm:$0xff]
    %v116 = vld [vmem:[#allocation5 + $0x60] sm:$0xff]
    %v117 = vld [vmem:[#allocation5 + $0x68] sm:$0xff]
    %v118 = vld [vmem:[#allocation5 + $0x70] sm:$0xff]
    %v119 = vld [vmem:[#allocation5 + $0x78] sm:$0xff]
    %v120 = vld [vmem:[#allocation5 + $0x80] sm:$0xff]
    %v121 = vld [vmem:[#allocation5 + $0x88] sm:$0xff]
    %v122 = vld [vmem:[#allocation5 + $0x90] sm:$0xff]
    %v123 = vld [vmem:[#allocation5 + $0x98] sm:$0xff]
    %v124 = vld [vmem:[#allocation5 + $0xa0] sm:$0xff]
    %v125 = vld [vmem:[#allocation5 + $0xa8] sm:$0xff]
    %v126 = vld [vmem:[#allocation5 + $0xb0] sm:$0xff]
    %v127 = vld [vmem:[#allocation5 + $0xb8] sm:$0xff]
    %v128 = vld [vmem:[#allocation5 + $0xc0] sm:$0xff]
    %v129 = vld [vmem:[#allocation5 + $0xc8] sm:$0xff]
    %v130 = vld [vmem:[#allocation5 + $0xd0] sm:$0xff]
    %v131 = vld [vmem:[#allocation5 + $0xd8] sm:$0xff]
    %v132 = vld [vmem:[#allocation5 + $0xe0] sm:$0xff]
    %v133 = vld [vmem:[#allocation5 + $0xe8] sm:$0xff]
    %v134 = vld [vmem:[#allocation5 + $0xf0] sm:$0xff]
    %v135 = vld [vmem:[#allocation5 + $0xf8] sm:$0xff]
    %136 = vmatprep.subr.mxu0 0.0
    %137 = vmatpush1.msra.mxu0 %v119
    %138 = vmatprep.subr.mxu0 0.0
    %139 = vmatpush1.msra.mxu0 %v118
    %140 = vmatprep.subr.mxu0 0.0
    %141 = vmatpush1.msra.mxu0 %v117
    %142 = vmatprep.subr.mxu0 0.0
    %143 = vmatpush1.msra.mxu0 %v116
    %144 = vmatprep.subr.mxu0 0.0
    %145 = vmatpush1.msra.mxu0 %v115
    %146 = vmatprep.subr.mxu0 0.0
    %147 = vmatpush1.msra.mxu0 %v114
    %148 = vmatprep.subr.mxu0 0.0
    %149 = vmatpush1.msra.mxu0 %v113
    %150 = vmatprep.subr.mxu0 0.0
    %151 = vmatpush1.msra.mxu0 %v112
    %152 = vmatprep.subr.mxu0 0.0
    %153 = vmatpush1.msra.mxu0 %v111
    %154 = vmatprep.subr.mxu0 0.0
    %155 = vmatpush1.msra.mxu0 %v110
    %156 = vmatprep.subr.mxu0 0.0
    %157 = vmatpush1.msra.mxu0 %v109
    %158 = vmatprep.subr.mxu0 0.0
    %159 = vmatpush1.msra.mxu0 %v108
    %160 = vmatprep.subr.mxu0 0.0
    %161 = vmatpush1.msra.mxu0 %v107
    %162 = vmatprep.subr.mxu0 0.0
    %163 = vmatpush1.msra.mxu0 %v106
    %164 = vmatprep.subr.mxu0 0.0
    %165 = vmatpush1.msra.mxu0 %v105
    %166 = vmatprep.subr.mxu0 0.0
    %167 = vmatpush1.msra.mxu0 %v104
    %168 = vmatprep.subr.mxu0 0.0
    %169 = vmatpush2.msra.mxu0 %v135
    %170 = vmatprep.subr.mxu0 0.0
    %171 = vmatpush2.msra.mxu0 %v134
    %172 = vmatprep.subr.mxu0 0.0
    %173 = vmatpush2.msra.mxu0 %v133
    %174 = vmatprep.subr.mxu0 0.0
    %175 = vmatpush2.msra.mxu0 %v132
    %176 = vmatprep.subr.mxu0 0.0
    %177 = vmatpush2.msra.mxu0 %v131
    %178 = vmatprep.subr.mxu0 0.0
    %179 = vmatpush2.msra.mxu0 %v130
    %180 = vmatprep.subr.mxu0 0.0
    %181 = vmatpush2.msra.mxu0 %v129
    %182 = vmatprep.subr.mxu0 0.0
    %183 = vmatpush2.msra.mxu0 %v128
    %184 = vmatprep.subr.mxu0 0.0
    %185 = vmatpush2.msra.mxu0 %v127
    %186 = vmatprep.subr.mxu0 0.0
    %187 = vmatpush2.msra.mxu0 %v126
    %188 = vmatprep.subr.mxu0 0.0
    %189 = vmatpush2.msra.mxu0 %v125
    %190 = vmatprep.subr.mxu0 0.0
    %191 = vmatpush2.msra.mxu0 %v124
    %192 = vmatprep.subr.mxu0 0.0
    %193 = vmatpush2.msra.mxu0 %v123
    %194 = vmatprep.subr.mxu0 0.0
    %195 = vmatpush2.msra.mxu0 %v122
    %196 = vmatprep.subr.mxu0 0.0
    %197 = vmatpush2.msra.mxu0 %v121
    %198 = vmatprep.subr.mxu0 0.0
    %199 = vmatpush2.msra.mxu0 %v120
    %200 = vmatprep.mubr.f32.mxu0 %v41
    %201 = vmatmul.mubr.f32.gmra.mxu0 %v40
    %v202 = vpop.f32.mrf.mxu0
    %v203 = vadd.f32 0.0, %v202
    %v204 = vpop.f32.mrf.mxu0
    %205 = vmatprep.mubr.f32.mxu0 %v43
    %206 = vmatmul.mubr.f32.gmra.mxu0 %v42
    %v207 = vpop.f32.mrf.mxu0
    %v208 = vadd.f32 0.0, %v207
    %v209 = vpop.f32.mrf.mxu0
    %210 = vmatprep.mubr.f32.mxu0 %v45
    %211 = vmatmul.mubr.f32.gmra.mxu0 %v44
    %v212 = vpop.f32.mrf.mxu0
    %v213 = vadd.f32 0.0, %v212
    %v214 = vpop.f32.mrf.mxu0
    %215 = vmatprep.mubr.f32.mxu0 %v47
    %216 = vmatmul.mubr.f32.gmra.mxu0 %v46
    %v217 = vpop.f32.mrf.mxu0
    %v218 = vadd.f32 0.0, %v217
    %v219 = vpop.f32.mrf.mxu0
    %220 = vmatprep.mubr.f32.mxu0 %v49
    %221 = vmatmul.mubr.f32.gmra.mxu0 %v48
    %v222 = vpop.f32.mrf.mxu0
    %v223 = vadd.f32 0.0, %v222
    %v224 = vpop.f32.mrf.mxu0
    %225 = vmatprep.mubr.f32.mxu0 %v51
    %226 = vmatmul.mubr.f32.gmra.mxu0 %v50
    %v227 = vpop.f32.mrf.mxu0
    %v228 = vadd.f32 0.0, %v227
    %v229 = vpop.f32.mrf.mxu0
    %230 = vmatprep.mubr.f32.mxu0 %v53
    %231 = vmatmul.mubr.f32.gmra.mxu0 %v52
    %v232 = vpop.f32.mrf.mxu0
    %v233 = vadd.f32 0.0, %v232
    %v234 = vpop.f32.mrf.mxu0
    %235 = vmatprep.mubr.f32.mxu0 %v55
    %236 = vmatmul.mubr.f32.gmra.mxu0 %v54
    %v237 = vpop.f32.mrf.mxu0
    %v238 = vadd.f32 0.0, %v237
    %v239 = vpop.f32.mrf.mxu0
    %240 = vmatprep.mubr.f32.mxu0 %v57
    %241 = vmatmul.mubr.f32.gmra.mxu0 %v56
    %v242 = vpop.f32.mrf.mxu0
    %v243 = vadd.f32 0.0, %v242
    %v244 = vpop.f32.mrf.mxu0
    %245 = vmatprep.mubr.f32.mxu0 %v59
    %246 = vmatmul.mubr.f32.gmra.mxu0 %v58
    %v247 = vpop.f32.mrf.mxu0
    %v248 = vadd.f32 0.0, %v247
    %v249 = vpop.f32.mrf.mxu0
    %250 = vmatprep.mubr.f32.mxu0 %v61
    %251 = vmatmul.mubr.f32.gmra.mxu0 %v60
    %v252 = vpop.f32.mrf.mxu0
    %v253 = vadd.f32 0.0, %v252
    %v254 = vpop.f32.mrf.mxu0
    %255 = vmatprep.mubr.f32.mxu0 %v63
    %256 = vmatmul.mubr.f32.gmra.mxu0 %v62
    %v257 = vpop.f32.mrf.mxu0
    %v258 = vadd.f32 0.0, %v257
    %v259 = vpop.f32.mrf.mxu0
    %260 = vmatprep.mubr.f32.mxu0 %v65
    %261 = vmatmul.mubr.f32.gmra.mxu0 %v64
    %v262 = vpop.f32.mrf.mxu0
    %v263 = vadd.f32 0.0, %v262
    %v264 = vpop.f32.mrf.mxu0
    %265 = vmatprep.mubr.f32.mxu0 %v67
    %266 = vmatmul.mubr.f32.gmra.mxu0 %v66
    %v267 = vpop.f32.mrf.mxu0
    %v268 = vadd.f32 0.0, %v267
    %v269 = vpop.f32.mrf.mxu0
    %270 = vmatprep.mubr.f32.mxu0 %v69
    %271 = vmatmul.mubr.f32.gmra.mxu0 %v68
    %v272 = vpop.f32.mrf.mxu0
    %v273 = vadd.f32 0.0, %v272
    %v274 = vpop.f32.mrf.mxu0
    %275 = vmatprep.mubr.f32.mxu0 %v71
    %276 = vmatmul.mubr.f32.gmra.mxu0 %v70
    %v277 = vpop.f32.mrf.mxu0
    %v278 = vadd.f32 0.0, %v277
    %v279 = vpop.f32.mrf.mxu0
    %280 = vmatprep.mubr.f32.mxu0 %v73
    %281 = vmatmul.mubr.f32.gmra.mxu0 %v72
    %v282 = vpop.f32.mrf.mxu0
    %v283 = vadd.f32 0.0, %v282
    %v284 = vpop.f32.mrf.mxu0
    %285 = vmatprep.mubr.f32.mxu0 %v75
    %286 = vmatmul.mubr.f32.gmra.mxu0 %v74
    %v287 = vpop.f32.mrf.mxu0
    %v288 = vadd.f32 0.0, %v287
    %v289 = vpop.f32.mrf.mxu0
    %290 = vmatprep.mubr.f32.mxu0 %v77
    %291 = vmatmul.mubr.f32.gmra.mxu0 %v76
    %v292 = vpop.f32.mrf.mxu0
    %v293 = vadd.f32 0.0, %v292
    %v294 = vpop.f32.mrf.mxu0
    %295 = vmatprep.mubr.f32.mxu0 %v79
    %296 = vmatmul.mubr.f32.gmra.mxu0 %v78
    %v297 = vpop.f32.mrf.mxu0
    %v298 = vadd.f32 0.0, %v297
    %v299 = vpop.f32.mrf.mxu0
    %300 = vmatprep.mubr.f32.mxu0 %v81
    %301 = vmatmul.mubr.f32.gmra.mxu0 %v80
    %v302 = vpop.f32.mrf.mxu0
    %v303 = vadd.f32 0.0, %v302
    %v304 = vpop.f32.mrf.mxu0
    %305 = vmatprep.mubr.f32.mxu0 %v83
    %306 = vmatmul.mubr.f32.gmra.mxu0 %v82
    %v307 = vpop.f32.mrf.mxu0
    %v308 = vadd.f32 0.0, %v307
    %v309 = vpop.f32.mrf.mxu0
    %310 = vmatprep.mubr.f32.mxu0 %v85
    %311 = vmatmul.mubr.f32.gmra.mxu0 %v84
    %v312 = vpop.f32.mrf.mxu0
    %v313 = vadd.f32 0.0, %v312
    %v314 = vpop.f32.mrf.mxu0
    %315 = vmatprep.mubr.f32.mxu0 %v87
    %316 = vmatmul.mubr.f32.gmra.mxu0 %v86
    %v317 = vpop.f32.mrf.mxu0
    %v318 = vadd.f32 0.0, %v317
    %v319 = vpop.f32.mrf.mxu0
    %320 = vmatprep.mubr.f32.mxu0 %v89
    %321 = vmatmul.mubr.f32.gmra.mxu0 %v88
    %v322 = vpop.f32.mrf.mxu0
    %v323 = vadd.f32 0.0, %v322
    %v324 = vpop.f32.mrf.mxu0
    %325 = vmatprep.mubr.f32.mxu0 %v91
    %326 = vmatmul.mubr.f32.gmra.mxu0 %v90
    %v327 = vpop.f32.mrf.mxu0
    %v328 = vadd.f32 0.0, %v327
    %v329 = vpop.f32.mrf.mxu0
    %330 = vmatprep.mubr.f32.mxu0 %v93
    %331 = vmatmul.mubr.f32.gmra.mxu0 %v92
    %v332 = vpop.f32.mrf.mxu0
    %v333 = vadd.f32 0.0, %v332
    %v334 = vpop.f32.mrf.mxu0
    %335 = vmatprep.mubr.f32.mxu0 %v95
    %336 = vmatmul.mubr.f32.gmra.mxu0 %v94
    %v337 = vpop.f32.mrf.mxu0
    %v338 = vadd.f32 0.0, %v337
    %v339 = vpop.f32.mrf.mxu0
    %340 = vmatprep.mubr.f32.mxu0 %v97
    %341 = vmatmul.mubr.f32.gmra.mxu0 %v96
    %v342 = vpop.f32.mrf.mxu0
    %v343 = vadd.f32 0.0, %v342
    %v344 = vpop.f32.mrf.mxu0
    %345 = vmatprep.mubr.f32.mxu0 %v99
    %346 = vmatmul.mubr.f32.gmra.mxu0 %v98
    %v347 = vpop.f32.mrf.mxu0
    %v348 = vadd.f32 0.0, %v347
    %v349 = vpop.f32.mrf.mxu0
    %350 = vmatprep.mubr.f32.mxu0 %v101
    %351 = vmatmul.mubr.f32.gmra.mxu0 %v100
    %v352 = vpop.f32.mrf.mxu0
    %v353 = vadd.f32 0.0, %v352
    %v354 = vpop.f32.mrf.mxu0
    %355 = vmatprep.mubr.f32.mxu0 %v103
    %356 = vmatmul.mubr.f32.gmra.mxu0 %v102
    %v357 = vpop.f32.mrf.mxu0
    %v358 = vadd.f32 0.0, %v357
    %v359 = vpop.f32.mrf.mxu0
    %360 = vdwg.mxu0
    %361 = vmatprep.subr.mxu0 0.0
    %362 = vmatpush1.msra.mxu0 %v278
    %363 = vmatprep.subr.mxu0 0.0
    %364 = vmatpush1.msra.mxu0 %v273
    %365 = vmatprep.subr.mxu0 0.0
    %366 = vmatpush1.msra.mxu0 %v268
    %367 = vmatprep.subr.mxu0 0.0
    %368 = vmatpush1.msra.mxu0 %v263
    %369 = vmatprep.subr.mxu0 0.0
    %370 = vmatpush1.msra.mxu0 %v258
    %371 = vmatprep.subr.mxu0 0.0
    %372 = vmatpush1.msra.mxu0 %v253
    %373 = vmatprep.subr.mxu0 0.0
    %374 = vmatpush1.msra.mxu0 %v248
    %375 = vmatprep.subr.mxu0 0.0
    %376 = vmatpush1.msra.mxu0 %v243
    %377 = vmatprep.subr.mxu0 0.0
    %378 = vmatpush1.msra.mxu0 %v238
    %379 = vmatprep.subr.mxu0 0.0
    %380 = vmatpush1.msra.mxu0 %v233
    %381 = vmatprep.subr.mxu0 0.0
    %382 = vmatpush1.msra.mxu0 %v228
    %383 = vmatprep.subr.mxu0 0.0
    %384 = vmatpush1.msra.mxu0 %v223
    %385 = vmatprep.subr.mxu0 0.0
    %386 = vmatpush1.msra.mxu0 %v218
    %387 = vmatprep.subr.mxu0 0.0
    %388 = vmatpush1.msra.mxu0 %v213
    %389 = vmatprep.subr.mxu0 0.0
    %390 = vmatpush1.msra.mxu0 %v208
    %391 = vmatprep.subr.mxu0 0.0
    %392 = vmatpush1.msra.mxu0 %v203
    %393 = vmatprep.subr.mxu0 0.0
    %394 = vmatpush2.msra.mxu0 %v358
    %395 = vmatprep.subr.mxu0 0.0
    %396 = vmatpush2.msra.mxu0 %v353
    %397 = vmatprep.subr.mxu0 0.0
    %398 = vmatpush2.msra.mxu0 %v348
    %399 = vmatprep.subr.mxu0 0.0
    %400 = vmatpush2.msra.mxu0 %v343
    %401 = vmatprep.subr.mxu0 0.0
    %402 = vmatpush2.msra.mxu0 %v338
    %403 = vmatprep.subr.mxu0 0.0
    %404 = vmatpush2.msra.mxu0 %v333
    %405 = vmatprep.subr.mxu0 0.0
    %406 = vmatpush2.msra.mxu0 %v328
    %407 = vmatprep.subr.mxu0 0.0
    %408 = vmatpush2.msra.mxu0 %v323
    %409 = vmatprep.subr.mxu0 0.0
    %410 = vmatpush2.msra.mxu0 %v318
    %411 = vmatprep.subr.mxu0 0.0
    %412 = vmatpush2.msra.mxu0 %v313
    %413 = vmatprep.subr.mxu0 0.0
    %414 = vmatpush2.msra.mxu0 %v308
    %415 = vmatprep.subr.mxu0 0.0
    %416 = vmatpush2.msra.mxu0 %v303
    %417 = vmatprep.subr.mxu0 0.0
    %418 = vmatpush2.msra.mxu0 %v298
    %419 = vmatprep.subr.mxu0 0.0
    %420 = vmatpush2.msra.mxu0 %v293
    %421 = vmatprep.subr.mxu0 0.0
    %422 = vmatpush2.msra.mxu0 %v288
    %423 = vmatprep.subr.mxu0 0.0
    %424 = vmatpush2.msra.mxu0 %v283
    %425 = vmatprep.mubr.f32.mxu0 %v41
    %426 = vmatmul.mubr.f32.gmra.mxu0 %v40
    %v427 = vpop.f32.mrf.mxu0
    %v428 = vadd.f32 0.0, %v427
    %v429 = vpop.f32.mrf.mxu0
    %430 = vmatprep.mubr.f32.mxu0 %v43
    %431 = vmatmul.mubr.f32.gmra.mxu0 %v42
    %v432 = vpop.f32.mrf.mxu0
    %v433 = vadd.f32 0.0, %v432
    %v434 = vpop.f32.mrf.mxu0
    %435 = vmatprep.mubr.f32.mxu0 %v45
    %436 = vmatmul.mubr.f32.gmra.mxu0 %v44
    %v437 = vpop.f32.mrf.mxu0
    %v438 = vadd.f32 0.0, %v437
    %v439 = vpop.f32.mrf.mxu0
    %440 = vmatprep.mubr.f32.mxu0 %v47
    %441 = vmatmul.mubr.f32.gmra.mxu0 %v46
    %v442 = vpop.f32.mrf.mxu0
    %v443 = vadd.f32 0.0, %v442
    %v444 = vpop.f32.mrf.mxu0
    %445 = vmatprep.mubr.f32.mxu0 %v49
    %446 = vmatmul.mubr.f32.gmra.mxu0 %v48
    %v447 = vpop.f32.mrf.mxu0
    %v448 = vadd.f32 0.0, %v447
    %v449 = vpop.f32.mrf.mxu0
    %450 = vmatprep.mubr.f32.mxu0 %v51
    %451 = vmatmul.mubr.f32.gmra.mxu0 %v50
    %v452 = vpop.f32.mrf.mxu0
    %v453 = vadd.f32 0.0, %v452
    %v454 = vpop.f32.mrf.mxu0
    %455 = vmatprep.mubr.f32.mxu0 %v53
    %456 = vmatmul.mubr.f32.gmra.mxu0 %v52
    %v457 = vpop.f32.mrf.mxu0
    %v458 = vadd.f32 0.0, %v457
    %v459 = vpop.f32.mrf.mxu0
    %460 = vmatprep.mubr.f32.mxu0 %v55
    %461 = vmatmul.mubr.f32.gmra.mxu0 %v54
    %v462 = vpop.f32.mrf.mxu0
    %v463 = vadd.f32 0.0, %v462
    %v464 = vpop.f32.mrf.mxu0
    %465 = vmatprep.mubr.f32.mxu0 %v57
    %466 = vmatmul.mubr.f32.gmra.mxu0 %v56
    %v467 = vpop.f32.mrf.mxu0
    %v468 = vadd.f32 0.0, %v467
    %v469 = vpop.f32.mrf.mxu0
    %470 = vmatprep.mubr.f32.mxu0 %v59
    %471 = vmatmul.mubr.f32.gmra.mxu0 %v58
    %v472 = vpop.f32.mrf.mxu0
    %v473 = vadd.f32 0.0, %v472
    %v474 = vpop.f32.mrf.mxu0
    %475 = vmatprep.mubr.f32.mxu0 %v61
    %476 = vmatmul.mubr.f32.gmra.mxu0 %v60
    %v477 = vpop.f32.mrf.mxu0
    %v478 = vadd.f32 0.0, %v477
    %v479 = vpop.f32.mrf.mxu0
    %480 = vmatprep.mubr.f32.mxu0 %v63
    %481 = vmatmul.mubr.f32.gmra.mxu0 %v62
    %v482 = vpop.f32.mrf.mxu0
    %v483 = vadd.f32 0.0, %v482
    %v484 = vpop.f32.mrf.mxu0
    %485 = vmatprep.mubr.f32.mxu0 %v65
    %486 = vmatmul.mubr.f32.gmra.mxu0 %v64
    %v487 = vpop.f32.mrf.mxu0
    %v488 = vadd.f32 0.0, %v487
    %v489 = vpop.f32.mrf.mxu0
    %490 = vmatprep.mubr.f32.mxu0 %v67
    %491 = vmatmul.mubr.f32.gmra.mxu0 %v66
    %v492 = vpop.f32.mrf.mxu0
    %v493 = vadd.f32 0.0, %v492
    %v494 = vpop.f32.mrf.mxu0
    %495 = vmatprep.mubr.f32.mxu0 %v69
    %496 = vmatmul.mubr.f32.gmra.mxu0 %v68
    %v497 = vpop.f32.mrf.mxu0
    %v498 = vadd.f32 0.0, %v497
    %v499 = vpop.f32.mrf.mxu0
    %500 = vmatprep.mubr.f32.mxu0 %v71
    %501 = vmatmul.mubr.f32.gmra.mxu0 %v70
    %v502 = vpop.f32.mrf.mxu0
    %v503 = vadd.f32 0.0, %v502
    %v504 = vpop.f32.mrf.mxu0
    %505 = vmatprep.mubr.f32.mxu0 %v73
    %506 = vmatmul.mubr.f32.gmra.mxu0 %v72
    %v507 = vpop.f32.mrf.mxu0
    %v508 = vadd.f32 0.0, %v507
    %v509 = vpop.f32.mrf.mxu0
    %510 = vmatprep.mubr.f32.mxu0 %v75
    %511 = vmatmul.mubr.f32.gmra.mxu0 %v74
    %v512 = vpop.f32.mrf.mxu0
    %v513 = vadd.f32 0.0, %v512
    %v514 = vpop.f32.mrf.mxu0
    %515 = vmatprep.mubr.f32.mxu0 %v77
    %516 = vmatmul.mubr.f32.gmra.mxu0 %v76
    %v517 = vpop.f32.mrf.mxu0
    %v518 = vadd.f32 0.0, %v517
    %v519 = vpop.f32.mrf.mxu0
    %520 = vmatprep.mubr.f32.mxu0 %v79
    %521 = vmatmul.mubr.f32.gmra.mxu0 %v78
    %v522 = vpop.f32.mrf.mxu0
    %v523 = vadd.f32 0.0, %v522
    %v524 = vpop.f32.mrf.mxu0
    %525 = vmatprep.mubr.f32.mxu0 %v81
    %526 = vmatmul.mubr.f32.gmra.mxu0 %v80
    %v527 = vpop.f32.mrf.mxu0
    %v528 = vadd.f32 0.0, %v527
    %v529 = vpop.f32.mrf.mxu0
    %530 = vmatprep.mubr.f32.mxu0 %v83
    %531 = vmatmul.mubr.f32.gmra.mxu0 %v82
    %v532 = vpop.f32.mrf.mxu0
    %v533 = vadd.f32 0.0, %v532
    %v534 = vpop.f32.mrf.mxu0
    %535 = vmatprep.mubr.f32.mxu0 %v85
    %536 = vmatmul.mubr.f32.gmra.mxu0 %v84
    %v537 = vpop.f32.mrf.mxu0
    %v538 = vadd.f32 0.0, %v537
    %v539 = vpop.f32.mrf.mxu0
    %540 = vmatprep.mubr.f32.mxu0 %v87
    %541 = vmatmul.mubr.f32.gmra.mxu0 %v86
    %v542 = vpop.f32.mrf.mxu0
    %v543 = vadd.f32 0.0, %v542
    %v544 = vpop.f32.mrf.mxu0
    %545 = vmatprep.mubr.f32.mxu0 %v89
    %546 = vmatmul.mubr.f32.gmra.mxu0 %v88
    %v547 = vpop.f32.mrf.mxu0
    %v548 = vadd.f32 0.0, %v547
    %v549 = vpop.f32.mrf.mxu0
    %550 = vmatprep.mubr.f32.mxu0 %v91
    %551 = vmatmul.mubr.f32.gmra.mxu0 %v90
    %v552 = vpop.f32.mrf.mxu0
    %v553 = vadd.f32 0.0, %v552
    %v554 = vpop.f32.mrf.mxu0
    %555 = vmatprep.mubr.f32.mxu0 %v93
    %556 = vmatmul.mubr.f32.gmra.mxu0 %v92
    %v557 = vpop.f32.mrf.mxu0
    %v558 = vadd.f32 0.0, %v557
    %v559 = vpop.f32.mrf.mxu0
    %560 = vmatprep.mubr.f32.mxu0 %v95
    %561 = vmatmul.mubr.f32.gmra.mxu0 %v94
    %v562 = vpop.f32.mrf.mxu0
    %v563 = vadd.f32 0.0, %v562
    %v564 = vpop.f32.mrf.mxu0
    %565 = vmatprep.mubr.f32.mxu0 %v97
    %566 = vmatmul.mubr.f32.gmra.mxu0 %v96
    %v567 = vpop.f32.mrf.mxu0
    %v568 = vadd.f32 0.0, %v567
    %v569 = vpop.f32.mrf.mxu0
    %570 = vmatprep.mubr.f32.mxu0 %v99
    %571 = vmatmul.mubr.f32.gmra.mxu0 %v98
    %v572 = vpop.f32.mrf.mxu0
    %v573 = vadd.f32 0.0, %v572
    %v574 = vpop.f32.mrf.mxu0
    %575 = vmatprep.mubr.f32.mxu0 %v101
    %576 = vmatmul.mubr.f32.gmra.mxu0 %v100
    %v577 = vpop.f32.mrf.mxu0
    %v578 = vadd.f32 0.0, %v577
    %v579 = vpop.f32.mrf.mxu0
    %580 = vmatprep.mubr.f32.mxu0 %v103
    %581 = vmatmul.mubr.f32.gmra.mxu0 %v102
    %v582 = vpop.f32.mrf.mxu0
    %v583 = vadd.f32 0.0, %v582
    %v584 = vpop.f32.mrf.mxu0
    %585 = vdwg.mxu0
    %v586 = vmul.f32 %v428, 0.9
    %v587 = vmul.f32 %v433, 0.9
    %v588 = vmul.f32 %v438, 0.9
    %v589 = vmul.f32 %v443, 0.9
    %v590 = vmul.f32 %v448, 0.9
    %v591 = vmul.f32 %v453, 0.9
    %v592 = vmul.f32 %v458, 0.9
    %v593 = vmul.f32 %v463, 0.9
    %v594 = vmul.f32 %v468, 0.9
    %v595 = vmul.f32 %v473, 0.9
    %v596 = vmul.f32 %v478, 0.9
    %v597 = vmul.f32 %v483, 0.9
    %v598 = vmul.f32 %v488, 0.9
    %v599 = vmul.f32 %v493, 0.9
    %v600 = vmul.f32 %v498, 0.9
    %v601 = vmul.f32 %v503, 0.9
    %v602 = vmul.f32 %v508, 0.9
    %v603 = vmul.f32 %v513, 0.9
    %v604 = vmul.f32 %v518, 0.9
    %v605 = vmul.f32 %v523, 0.9
    %v606 = vmul.f32 %v528, 0.9
    %v607 = vmul.f32 %v533, 0.9
    %v608 = vmul.f32 %v538, 0.9
    %v609 = vmul.f32 %v543, 0.9
    %v610 = vmul.f32 %v548, 0.9
    %v611 = vmul.f32 %v553, 0.9
    %v612 = vmul.f32 %v558, 0.9
    %v613 = vmul.f32 %v563, 0.9
    %v614 = vmul.f32 %v568, 0.9
    %v615 = vmul.f32 %v573, 0.9
    %v616 = vmul.f32 %v578, 0.9
    %v617 = vmul.f32 %v583, 0.9
    %v618 = vmul.f32 %v203, 0.1
    %v619 = vmul.f32 %v208, 0.1
    %v620 = vmul.f32 %v213, 0.1
    %v621 = vmul.f32 %v218, 0.1
    %v622 = vmul.f32 %v223, 0.1
    %v623 = vmul.f32 %v228, 0.1
    %v624 = vmul.f32 %v233, 0.1
    %v625 = vmul.f32 %v238, 0.1
    %v626 = vmul.f32 %v243, 0.1
    %v627 = vmul.f32 %v248, 0.1
    %v628 = vmul.f32 %v253, 0.1
    %v629 = vmul.f32 %v258, 0.1
    %v630 = vmul.f32 %v263, 0.1
    %v631 = vmul.f32 %v268, 0.1
    %v632 = vmul.f32 %v273, 0.1
    %v633 = vmul.f32 %v278, 0.1
    %v634 = vmul.f32 %v283, 0.1
    %v635 = vmul.f32 %v288, 0.1
    %v636 = vmul.f32 %v293, 0.1
    %v637 = vmul.f32 %v298, 0.1
    %v638 = vmul.f32 %v303, 0.1
    %v639 = vmul.f32 %v308, 0.1
    %v640 = vmul.f32 %v313, 0.1
    %v641 = vmul.f32 %v318, 0.1
    %v642 = vmul.f32 %v323, 0.1
    %v643 = vmul.f32 %v328, 0.1
    %v644 = vmul.f32 %v333, 0.1
    %v645 = vmul.f32 %v338, 0.1
    %v646 = vmul.f32 %v343, 0.1
    %v647 = vmul.f32 %v348, 0.1
    %v648 = vmul.f32 %v353, 0.1
    %v649 = vmul.f32 %v358, 0.1
    %v650 = vadd.f32 %v586, %v618
    %v651 = vadd.f32 %v587, %v619
    %v652 = vadd.f32 %v588, %v620
    %v653 = vadd.f32 %v589, %v621
    %v654 = vadd.f32 %v590, %v622
    %v655 = vadd.f32 %v591, %v623
    %v656 = vadd.f32 %v592, %v624
    %v657 = vadd.f32 %v593, %v625
    %v658 = vadd.f32 %v594, %v626
    %v659 = vadd.f32 %v595, %v627
    %v660 = vadd.f32 %v596, %v628
    %v661 = vadd.f32 %v597, %v629
    %v662 = vadd.f32 %v598, %v630
    %v663 = vadd.f32 %v599, %v631
    %v664 = vadd.f32 %v600, %v632
    %v665 = vadd.f32 %v601, %v633
    %v666 = vadd.f32 %v602, %v634
    %v667 = vadd.f32 %v603, %v635
    %v668 = vadd.f32 %v604, %v636
    %v669 = vadd.f32 %v605, %v637
    %v670 = vadd.f32 %v606, %v638
    %v671 = vadd.f32 %v607, %v639
    %v672 = vadd.f32 %v608, %v640
    %v673 = vadd.f32 %v609, %v641
    %v674 = vadd.f32 %v610, %v642
    %v675 = vadd.f32 %v611, %v643
    %v676 = vadd.f32 %v612, %v644
    %v677 = vadd.f32 %v613, %v645
    %v678 = vadd.f32 %v614, %v646
    %v679 = vadd.f32 %v615, %v647
    %v680 = vadd.f32 %v616, %v648
    %v681 = vadd.f32 %v617, %v649
    %682 = vmatprep.subr.mxu0 0.0
    %683 = vmatpush1.msra.mxu0 %v665
    %684 = vmatprep.subr.mxu0 0.0
    %685 = vmatpush1.msra.mxu0 %v664
    %686 = vmatprep.subr.mxu0 0.0
    %687 = vmatpush1.msra.mxu0 %v663
    %688 = vmatprep.subr.mxu0 0.0
    %689 = vmatpush1.msra.mxu0 %v662
    %690 = vmatprep.subr.mxu0 0.0
    %691 = vmatpush1.msra.mxu0 %v661
    %692 = vmatprep.subr.mxu0 0.0
    %693 = vmatpush1.msra.mxu0 %v660
    %694 = vmatprep.subr.mxu0 0.0
    %695 = vmatpush1.msra.mxu0 %v659
    %696 = vmatprep.subr.mxu0 0.0
    %697 = vmatpush1.msra.mxu0 %v658
    %698 = vmatprep.subr.mxu0 0.0
    %699 = vmatpush1.msra.mxu0 %v657
    %700 = vmatprep.subr.mxu0 0.0
    %701 = vmatpush1.msra.mxu0 %v656
    %702 = vmatprep.subr.mxu0 0.0
    %703 = vmatpush1.msra.mxu0 %v655
    %704 = vmatprep.subr.mxu0 0.0
    %705 = vmatpush1.msra.mxu0 %v654
    %706 = vmatprep.subr.mxu0 0.0
    %707 = vmatpush1.msra.mxu0 %v653
    %708 = vmatprep.subr.mxu0 0.0
    %709 = vmatpush1.msra.mxu0 %v652
    %710 = vmatprep.subr.mxu0 0.0
    %711 = vmatpush1.msra.mxu0 %v651
    %712 = vmatprep.subr.mxu0 0.0
    %713 = vmatpush1.msra.mxu0 %v650
    %714 = vmatprep.subr.mxu0 0.0
    %715 = vmatpush2.msra.mxu0 %v681
    %716 = vmatprep.subr.mxu0 0.0
    %717 = vmatpush2.msra.mxu0 %v680
    %718 = vmatprep.subr.mxu0 0.0
    %719 = vmatpush2.msra.mxu0 %v679
    %720 = vmatprep.subr.mxu0 0.0
    %721 = vmatpush2.msra.mxu0 %v678
    %722 = vmatprep.subr.mxu0 0.0
    %723 = vmatpush2.msra.mxu0 %v677
    %724 = vmatprep.subr.mxu0 0.0
    %725 = vmatpush2.msra.mxu0 %v676
    %726 = vmatprep.subr.mxu0 0.0
    %727 = vmatpush2.msra.mxu0 %v675
    %728 = vmatprep.subr.mxu0 0.0
    %729 = vmatpush2.msra.mxu0 %v674
    %730 = vmatprep.subr.mxu0 0.0
    %731 = vmatpush2.msra.mxu0 %v673
    %732 = vmatprep.subr.mxu0 0.0
    %733 = vmatpush2.msra.mxu0 %v672
    %734 = vmatprep.subr.mxu0 0.0
    %735 = vmatpush2.msra.mxu0 %v671
    %736 = vmatprep.subr.mxu0 0.0
    %737 = vmatpush2.msra.mxu0 %v670
    %738 = vmatprep.subr.mxu0 0.0
    %739 = vmatpush2.msra.mxu0 %v669
    %740 = vmatprep.subr.mxu0 0.0
    %741 = vmatpush2.msra.mxu0 %v668
    %742 = vmatprep.subr.mxu0 0.0
    %743 = vmatpush2.msra.mxu0 %v667
    %744 = vmatprep.subr.mxu0 0.0
    %745 = vmatpush2.msra.mxu0 %v666
    %746 = vmatprep.mubr.f32.mxu0 %v41
    %747 = vmatmul.mubr.f32.gmra.mxu0 %v40
    %v748 = vpop.f32.mrf.mxu0
    %v749 = vadd.f32 0.0, %v748
    %v750 = vpop.f32.mrf.mxu0
    %751 = vmatprep.mubr.f32.mxu0 %v43
    %752 = vmatmul.mubr.f32.gmra.mxu0 %v42
    %v753 = vpop.f32.mrf.mxu0
    %v754 = vadd.f32 0.0, %v753
    %v755 = vpop.f32.mrf.mxu0
    %756 = vmatprep.mubr.f32.mxu0 %v45
    %757 = vmatmul.mubr.f32.gmra.mxu0 %v44
    %v758 = vpop.f32.mrf.mxu0
    %v759 = vadd.f32 0.0, %v758
    %v760 = vpop.f32.mrf.mxu0
    %761 = vmatprep.mubr.f32.mxu0 %v47
    %762 = vmatmul.mubr.f32.gmra.mxu0 %v46
    %v763 = vpop.f32.mrf.mxu0
    %v764 = vadd.f32 0.0, %v763
    %v765 = vpop.f32.mrf.mxu0
    %766 = vmatprep.mubr.f32.mxu0 %v49
    %767 = vmatmul.mubr.f32.gmra.mxu0 %v48
    %v768 = vpop.f32.mrf.mxu0
    %v769 = vadd.f32 0.0, %v768
    %v770 = vpop.f32.mrf.mxu0
    %771 = vmatprep.mubr.f32.mxu0 %v51
    %772 = vmatmul.mubr.f32.gmra.mxu0 %v50
    %v773 = vpop.f32.mrf.mxu0
    %v774 = vadd.f32 0.0, %v773
    %v775 = vpop.f32.mrf.mxu0
    %776 = vmatprep.mubr.f32.mxu0 %v53
    %777 = vmatmul.mubr.f32.gmra.mxu0 %v52
    %v778 = vpop.f32.mrf.mxu0
    %v779 = vadd.f32 0.0, %v778
    %v780 = vpop.f32.mrf.mxu0
    %781 = vmatprep.mubr.f32.mxu0 %v55
    %782 = vmatmul.mubr.f32.gmra.mxu0 %v54
    %v783 = vpop.f32.mrf.mxu0
    %v784 = vadd.f32 0.0, %v783
    %v785 = vpop.f32.mrf.mxu0
    %786 = vmatprep.mubr.f32.mxu0 %v57
    %787 = vmatmul.mubr.f32.gmra.mxu0 %v56
    %v788 = vpop.f32.mrf.mxu0
    %v789 = vadd.f32 0.0, %v788
    %v790 = vpop.f32.mrf.mxu0
    %791 = vmatprep.mubr.f32.mxu0 %v59
    %792 = vmatmul.mubr.f32.gmra.mxu0 %v58
    %v793 = vpop.f32.mrf.mxu0
    %v794 = vadd.f32 0.0, %v793
    %v795 = vpop.f32.mrf.mxu0
    %796 = vmatprep.mubr.f32.mxu0 %v61
    %797 = vmatmul.mubr.f32.gmra.mxu0 %v60
    %v798 = vpop.f32.mrf.mxu0
    %v799 = vadd.f32 0.0, %v798
    %v800 = vpop.f32.mrf.mxu0
    %801 = vmatprep.mubr.f32.mxu0 %v63
    %802 = vmatmul.mubr.f32.gmra.mxu0 %v62
    %v803 = vpop.f32.mrf.mxu0
    %v804 = vadd.f32 0.0, %v803
    %v805 = vpop.f32.mrf.mxu0
    %806 = vmatprep.mubr.f32.mxu0 %v65
    %807 = vmatmul.mubr.f32.gmra.mxu0 %v64
    %v808 = vpop.f32.mrf.mxu0
    %v809 = vadd.f32 0.0, %v808
    %v810 = vpop.f32.mrf.mxu0
    %811 = vmatprep.mubr.f32.mxu0 %v67
    %812 = vmatmul.mubr.f32.gmra.mxu0 %v66
    %v813 = vpop.f32.mrf.mxu0
    %v814 = vadd.f32 0.0, %v813
    %v815 = vpop.f32.mrf.mxu0
    %816 = vmatprep.mubr.f32.mxu0 %v69
    %817 = vmatmul.mubr.f32.gmra.mxu0 %v68
    %v818 = vpop.f32.mrf.mxu0
    %v819 = vadd.f32 0.0, %v818
    %v820 = vpop.f32.mrf.mxu0
    %821 = vmatprep.mubr.f32.mxu0 %v71
    %822 = vmatmul.mubr.f32.gmra.mxu0 %v70
    %v823 = vpop.f32.mrf.mxu0
    %v824 = vadd.f32 0.0, %v823
    %v825 = vpop.f32.mrf.mxu0
    %826 = vmatprep.mubr.f32.mxu0 %v73
    %827 = vmatmul.mubr.f32.gmra.mxu0 %v72
    %v828 = vpop.f32.mrf.mxu0
    %v829 = vadd.f32 0.0, %v828
    %v830 = vpop.f32.mrf.mxu0
    %831 = vmatprep.mubr.f32.mxu0 %v75
    %832 = vmatmul.mubr.f32.gmra.mxu0 %v74
    %v833 = vpop.f32.mrf.mxu0
    %v834 = vadd.f32 0.0, %v833
    %v835 = vpop.f32.mrf.mxu0
    %836 = vmatprep.mubr.f32.mxu0 %v77
    %837 = vmatmul.mubr.f32.gmra.mxu0 %v76
    %v838 = vpop.f32.mrf.mxu0
    %v839 = vadd.f32 0.0, %v838
    %v840 = vpop.f32.mrf.mxu0
    %841 = vmatprep.mubr.f32.mxu0 %v79
    %842 = vmatmul.mubr.f32.gmra.mxu0 %v78
    %v843 = vpop.f32.mrf.mxu0
    %v844 = vadd.f32 0.0, %v843
    %v845 = vpop.f32.mrf.mxu0
    %846 = vmatprep.mubr.f32.mxu0 %v81
    %847 = vmatmul.mubr.f32.gmra.mxu0 %v80
    %v848 = vpop.f32.mrf.mxu0
    %v849 = vadd.f32 0.0, %v848
    %v850 = vpop.f32.mrf.mxu0
    %851 = vmatprep.mubr.f32.mxu0 %v83
    %852 = vmatmul.mubr.f32.gmra.mxu0 %v82
    %v853 = vpop.f32.mrf.mxu0
    %v854 = vadd.f32 0.0, %v853
    %v855 = vpop.f32.mrf.mxu0
    %856 = vmatprep.mubr.f32.mxu0 %v85
    %857 = vmatmul.mubr.f32.gmra.mxu0 %v84
    %v858 = vpop.f32.mrf.mxu0
    %v859 = vadd.f32 0.0, %v858
    %v860 = vpop.f32.mrf.mxu0
    %861 = vmatprep.mubr.f32.mxu0 %v87
    %862 = vmatmul.mubr.f32.gmra.mxu0 %v86
    %v863 = vpop.f32.mrf.mxu0
    %v864 = vadd.f32 0.0, %v863
    %v865 = vpop.f32.mrf.mxu0
    %866 = vmatprep.mubr.f32.mxu0 %v89
    %867 = vmatmul.mubr.f32.gmra.mxu0 %v88
    %v868 = vpop.f32.mrf.mxu0
    %v869 = vadd.f32 0.0, %v868
    %v870 = vpop.f32.mrf.mxu0
    %871 = vmatprep.mubr.f32.mxu0 %v91
    %872 = vmatmul.mubr.f32.gmra.mxu0 %v90
    %v873 = vpop.f32.mrf.mxu0
    %v874 = vadd.f32 0.0, %v873
    %v875 = vpop.f32.mrf.mxu0
    %876 = vmatprep.mubr.f32.mxu0 %v93
    %877 = vmatmul.mubr.f32.gmra.mxu0 %v92
    %v878 = vpop.f32.mrf.mxu0
    %v879 = vadd.f32 0.0, %v878
    %v880 = vpop.f32.mrf.mxu0
    %881 = vmatprep.mubr.f32.mxu0 %v95
    %882 = vmatmul.mubr.f32.gmra.mxu0 %v94
    %v883 = vpop.f32.mrf.mxu0
    %v884 = vadd.f32 0.0, %v883
    %v885 = vpop.f32.mrf.mxu0
    %886 = vmatprep.mubr.f32.mxu0 %v97
    %887 = vmatmul.mubr.f32.gmra.mxu0 %v96
    %v888 = vpop.f32.mrf.mxu0
    %v889 = vadd.f32 0.0, %v888
    %v890 = vpop.f32.mrf.mxu0
    %891 = vmatprep.mubr.f32.mxu0 %v99
    %892 = vmatmul.mubr.f32.gmra.mxu0 %v98
    %v893 = vpop.f32.mrf.mxu0
    %v894 = vadd.f32 0.0, %v893
    %v895 = vpop.f32.mrf.mxu0
    %896 = vmatprep.mubr.f32.mxu0 %v101
    %897 = vmatmul.mubr.f32.gmra.mxu0 %v100
    %v898 = vpop.f32.mrf.mxu0
    %v899 = vadd.f32 0.0, %v898
    %v900 = vpop.f32.mrf.mxu0
    %901 = vmatprep.mubr.f32.mxu0 %v103
    %902 = vmatmul.mubr.f32.gmra.mxu0 %v102
    %v903 = vpop.f32.mrf.mxu0
    %v904 = vadd.f32 0.0, %v903
    %v905 = vpop.f32.mrf.mxu0
    %906 = vdwg.mxu0
    %v907 = vmul.f32 %v749, 0.9
    %v908 = vmul.f32 %v754, 0.9
    %v909 = vmul.f32 %v759, 0.9
    %v910 = vmul.f32 %v764, 0.9
    %v911 = vmul.f32 %v769, 0.9
    %v912 = vmul.f32 %v774, 0.9
    %v913 = vmul.f32 %v779, 0.9
    %v914 = vmul.f32 %v784, 0.9
    %v915 = vmul.f32 %v789, 0.9
    %v916 = vmul.f32 %v794, 0.9
    %v917 = vmul.f32 %v799, 0.9
    %v918 = vmul.f32 %v804, 0.9
    %v919 = vmul.f32 %v809, 0.9
    %v920 = vmul.f32 %v814, 0.9
    %v921 = vmul.f32 %v819, 0.9
    %v922 = vmul.f32 %v824, 0.9
    %v923 = vmul.f32 %v829, 0.9
    %v924 = vmul.f32 %v834, 0.9
    %v925 = vmul.f32 %v839, 0.9
    %v926 = vmul.f32 %v844, 0.9
    %v927 = vmul.f32 %v849, 0.9
    %v928 = vmul.f32 %v854, 0.9
    %v929 = vmul.f32 %v859, 0.9
    %v930 = vmul.f32 %v864, 0.9
    %v931 = vmul.f32 %v869, 0.9
    %v932 = vmul.f32 %v874, 0.9
    %v933 = vmul.f32 %v879, 0.9
    %v934 = vmul.f32 %v884, 0.9
    %v935 = vmul.f32 %v889, 0.9
    %v936 = vmul.f32 %v894, 0.9
    %v937 = vmul.f32 %v899, 0.9
    %v938 = vmul.f32 %v904, 0.9
    %v939 = vadd.f32 %v907, %v618
    %v940 = vadd.f32 %v908, %v619
    %v941 = vadd.f32 %v909, %v620
    %v942 = vadd.f32 %v910, %v621
    %v943 = vadd.f32 %v911, %v622
    %v944 = vadd.f32 %v912, %v623
    %v945 = vadd.f32 %v913, %v624
    %v946 = vadd.f32 %v914, %v625
    %v947 = vadd.f32 %v915, %v626
    %v948 = vadd.f32 %v916, %v627
    %v949 = vadd.f32 %v917, %v628
    %v950 = vadd.f32 %v918, %v629
    %v951 = vadd.f32 %v919, %v630
    %v952 = vadd.f32 %v920, %v631
    %v953 = vadd.f32 %v921, %v632
    %v954 = vadd.f32 %v922, %v633
    %v955 = vadd.f32 %v923, %v634
    %v956 = vadd.f32 %v924, %v635
    %v957 = vadd.f32 %v925, %v636
    %v958 = vadd.f32 %v926, %v637
    %v959 = vadd.f32 %v927, %v638
    %v960 = vadd.f32 %v928, %v639
    %v961 = vadd.f32 %v929, %v640
    %v962 = vadd.f32 %v930, %v641
    %v963 = vadd.f32 %v931, %v642
    %v964 = vadd.f32 %v932, %v643
    %v965 = vadd.f32 %v933, %v644
    %v966 = vadd.f32 %v934, %v645
    %v967 = vadd.f32 %v935, %v646
    %v968 = vadd.f32 %v936, %v647
    %v969 = vadd.f32 %v937, %v648
    %v970 = vadd.f32 %v938, %v649
    %971 = vst [vmem:[#allocation7] sm:$0xff] %v939
    %972 = vst [vmem:[#allocation7 + $0x8] sm:$0xff] %v940
    %973 = vst [vmem:[#allocation7 + $0x10] sm:$0xff] %v941
    %974 = vst [vmem:[#allocation7 + $0x18] sm:$0xff] %v942
    %975 = vst [vmem:[#allocation7 + $0x20] sm:$0xff] %v943
    %976 = vst [vmem:[#allocation7 + $0x28] sm:$0xff] %v944
    %977 = vst [vmem:[#allocation7 + $0x30] sm:$0xff] %v945
    %978 = vst [vmem:[#allocation7 + $0x38] sm:$0xff] %v946
    %979 = vst [vmem:[#allocation7 + $0x40] sm:$0xff] %v947
    %980 = vst [vmem:[#allocation7 + $0x48] sm:$0xff] %v948
    %981 = vst [vmem:[#allocation7 + $0x50] sm:$0xff] %v949
    %982 = vst [vmem:[#allocation7 + $0x58] sm:$0xff] %v950
    %983 = vst [vmem:[#allocation7 + $0x60] sm:$0xff] %v951
    %984 = vst [vmem:[#allocation7 + $0x68] sm:$0xff] %v952
    %985 = vst [vmem:[#allocation7 + $0x70] sm:$0xff] %v953
    %986 = vst [vmem:[#allocation7 + $0x78] sm:$0xff] %v954
    %987 = vst [vmem:[#allocation7 + $0x80] sm:$0xff] %v955
    %988 = vst [vmem:[#allocation7 + $0x88] sm:$0xff] %v956
    %989 = vst [vmem:[#allocation7 + $0x90] sm:$0xff] %v957
    %990 = vst [vmem:[#allocation7 + $0x98] sm:$0xff] %v958
    %991 = vst [vmem:[#allocation7 + $0xa0] sm:$0xff] %v959
    %992 = vst [vmem:[#allocation7 + $0xa8] sm:$0xff] %v960
    %993 = vst [vmem:[#allocation7 + $0xb0] sm:$0xff] %v961
    %994 = vst [vmem:[#allocation7 + $0xb8] sm:$0xff] %v962
    %995 = vst [vmem:[#allocation7 + $0xc0] sm:$0xff] %v963
    %996 = vst [vmem:[#allocation7 + $0xc8] sm:$0xff] %v964
    %997 = vst [vmem:[#allocation7 + $0xd0] sm:$0xff] %v965
    %998 = vst [vmem:[#allocation7 + $0xd8] sm:$0xff] %v966
    %999 = vst [vmem:[#allocation7 + $0xe0] sm:$0xff] %v967
    %1000 = vst [vmem:[#allocation7 + $0xe8] sm:$0xff] %v968
    %1001 = vst [vmem:[#allocation7 + $0xf0] sm:$0xff] %v969
    %1002 = vst [vmem:[#allocation7 + $0xf8] sm:$0xff] %v970
    // Predicated region
    $region18: #{tpu_custom_call.1} parent=1 // pred_check
      _
    $region19: #{tpu_custom_call.1} parent=1 // pred_check_branch
      %1004 = sbr.rel (0) target = $region21
    $region20: #{tpu_custom_call.1} parent=1 // pred_region
      %s1006 = ssub.s32 4096, 4096
      %1007 = vsyncadd [#allocation4], %s1006
      %s1008 = sshll.u32 [#allocation7], 4
      %s1009 = int_to_ptr.vmem [resolvable:$true] %s1008
      %1014 = dma.vmem_to_hbm [thread:$0]  %s1009, 4096, %s2, [#allocation4], 128, 128, 8
    $region21: #{tpu_custom_call.1} parent=1 // pred_fallthru
      _
    // Predicated region
    $region22: #{tpu_custom_call.1} parent=1 // pred_check
      _
    $region23: #{tpu_custom_call.1} parent=1 // pred_check_branch
      %1016 = sbr.rel (0) target = $region25
    $region24: #{tpu_custom_call.1} parent=1 // pred_region
      %1017 = dma.done [#allocation4], 4096
    $region25: #{tpu_custom_call.1} parent=1 // pred_fallthru
      _
    %1018 = vsyncpa [#allocation3], 1
    %1019 = vsyncpa [#allocation6], 1
    %1020 = vsyncpa [#allocation4], 1

</llo_original>
